<compile_context>
chip_gen: v5e
topology: v5e:2x2
jax: 0.10.0
libtpu: 0.0.40
codegen_flags: <defaults>
</compile_context>

<pallas_src>
import functools

import jax
import jax.numpy as jnp
from jax import lax
from jax.experimental import pallas as pl
from jax.experimental.pallas import tpu as pltpu


def conv_stats_kernel(xf_ref, w2_ref, b_ref, y_ref, psum_ref, psq_ref, *, width):
    """Fused im2col + 3x3 'same' conv for one batch element + partial BN statistics.

    xf_ref:   [Cin, L]       f32  flattened H-padded input, one zero lane at each end
                                  (L = (H+2)*W + 2)
    w2_ref:   [Cout, 9*Cin]  bf16 conv taps, (kh, kw, cin)-major
    b_ref:    [Cout, 1]      f32  conv bias
    y_ref:    [Cout, H*W]    f32  conv output (lane-dense)
    psum_ref: [Cout, 1]      f32  sum over H*W of the conv output
    psq_ref:  [Cout, 1]      f32  sum over H*W of the conv output squared
    """
    hw = y_ref.shape[-1]
    xfull = xf_ref[...]                                   # [Cin, L] f32, loaded once
    # column index j = p mod W of each output pixel, for in-kernel W-edge zeroing
    col = lax.broadcasted_iota(jnp.int32, (1, hw), 1) % width

    windows = []
    for kh in range(3):
        for kw in range(3):
            start = 1 + kh * width + (kw - 1)             # static offset into the flat buffer
            win = xfull[:, start:start + hw]              # [Cin, H*W]
            if kw == 0:                                   # tap reaches past the left edge
                win = jnp.where(col != 0, win, 0.0)
            elif kw == 2:                                 # tap reaches past the right edge
                win = jnp.where(col != width - 1, win, 0.0)
            windows.append(win.astype(jnp.bfloat16))      # per-tap cast for the MXU
    patches = jnp.concatenate(windows, axis=0)            # [9*Cin, H*W] bf16 im2col (built once)

    # single MXU matmul: bf16 operands, f32 accumulation
    conv = jnp.dot(w2_ref[...], patches, preferred_element_type=jnp.float32)  # [Cout, H*W]
    conv = conv + b_ref[...]

    y_ref[...] = conv
    psum_ref[...] = jnp.sum(conv, axis=1, keepdims=True)
    psq_ref[...] = jnp.sum(conv * conv, axis=1, keepdims=True)


def bn_lrelu_kernel(y_ref, psum_ref, psq_ref, gamma_ref, beta_ref, o_ref, *, inv_count):
    """Global BatchNorm (training-mode batch stats, eps=1e-5) + LeakyReLU(0.2)."""
    mean = jnp.sum(psum_ref[...], axis=0) * inv_count          # [Cout, 1]
    ex2 = jnp.sum(psq_ref[...], axis=0) * inv_count
    var = ex2 - mean * mean                                    # biased variance (PyTorch BN)
    inv_std = lax.rsqrt(var + 1e-5)
    scale = gamma_ref[...] * inv_std
    shift = beta_ref[...] - mean * scale
    y = y_ref[...] * scale + shift
    # TODO(synk): the 'cno_lrelu' activation (anti-aliased filtered lrelu with up/down-
    # sampling) is not reproduced; with in_size == out_size it reduces to LeakyReLU(0.2).
    o_ref[...] = jnp.where(y >= 0.0, y, 0.2 * y).astype(o_ref.dtype)


@jax.jit
def cno_block_forward(x_nchw, w_oihw, bias, gamma, beta):
    """x_nchw: [B, Cin, H, W] (PyTorch layout). Returns [B, Cout, H, W]."""
    B, Cin, H, W = x_nchw.shape
    Cout = w_oihw.shape[0]
    HW = H * W
    L = (H + 2) * W + 2

    # Pad rows only (H), flatten spatial, add one zero lane at each end so every tap window
    # has a non-negative static start. W-edge zeros are handled in-kernel by masking.
    xh = jnp.pad(x_nchw, ((0, 0), (0, 0), (1, 1), (0, 0))).reshape(B, Cin, (H + 2) * W)
    xf = jnp.pad(xh, ((0, 0), (0, 0), (1, 1))).astype(jnp.float32)

    # OIHW -> [Cout, kh, kw, Cin] -> [Cout, 9*Cin], matching the im2col (kh, kw, cin) order
    w2 = jnp.transpose(w_oihw, (0, 2, 3, 1)).reshape(Cout, 9 * Cin).astype(jnp.bfloat16)
    b2 = bias.reshape(Cout, 1).astype(jnp.float32)
    g2 = gamma.reshape(Cout, 1).astype(jnp.float32)
    be2 = beta.reshape(Cout, 1).astype(jnp.float32)

    cparams = pltpu.CompilerParams(
        dimension_semantics=("parallel",),      # batch programs can land on separate TCs (v7x)
        vmem_limit_bytes=32 * 1024 * 1024,      # explicit scoped-VMEM budget (safe v5e..v7x)
    )

    # ---- pass 1: conv + partial BN stats (per-batch-element) ----
    y_conv, psum, psq = pl.pallas_call(
        functools.partial(conv_stats_kernel, width=W),
        grid=(B,),
        in_specs=[
            pl.BlockSpec((None, Cin, L), lambda b: (b, 0, 0)),
            pl.BlockSpec((Cout, 9 * Cin), lambda b: (0, 0)),
            pl.BlockSpec((Cout, 1), lambda b: (0, 0)),
        ],
        out_specs=[
            pl.BlockSpec((None, Cout, HW), lambda b: (b, 0, 0)),
            pl.BlockSpec((None, Cout, 1), lambda b: (b, 0, 0)),
            pl.BlockSpec((None, Cout, 1), lambda b: (b, 0, 0)),
        ],
        out_shape=[
            jax.ShapeDtypeStruct((B, Cout, HW), jnp.float32),
            jax.ShapeDtypeStruct((B, Cout, 1), jnp.float32),
            jax.ShapeDtypeStruct((B, Cout, 1), jnp.float32),
        ],
        compiler_params=cparams,
        cost_estimate=pl.CostEstimate(
            flops=2 * B * HW * 9 * Cin * Cout,
            transcendentals=0,
            bytes_accessed=B * Cin * L * 4 + Cout * 9 * Cin * 2 + B * Cout * HW * 4,
        ),
    )(xf, w2, b2)

    # ---- pass 2: global BN stats + normalize + LeakyReLU (lane-dense NCHW-ordered output) ----
    out = pl.pallas_call(
        functools.partial(bn_lrelu_kernel, inv_count=1.0 / float(B * HW)),
        grid=(B,),
        in_specs=[
            pl.BlockSpec((None, Cout, HW), lambda b: (b, 0, 0)),
            pl.BlockSpec((B, Cout, 1), lambda b: (0, 0, 0)),
            pl.BlockSpec((B, Cout, 1), lambda b: (0, 0, 0)),
            pl.BlockSpec((Cout, 1), lambda b: (0, 0)),
            pl.BlockSpec((Cout, 1), lambda b: (0, 0)),
        ],
        out_specs=pl.BlockSpec((None, Cout, HW), lambda b: (b, 0, 0)),
        out_shape=jax.ShapeDtypeStruct((B, Cout, HW), x_nchw.dtype),
        compiler_params=cparams,
        cost_estimate=pl.CostEstimate(
            flops=4 * B * Cout * HW,
            transcendentals=Cout,
            bytes_accessed=2 * B * Cout * HW * 4,
        ),
    )(y_conv, psum, psq, g2, be2)

    # already NCHW-ordered: a free reshape, no transpose
    return out.reshape(B, Cout, H, W)


def reference_forward(x_nchw, w_oihw, bias, gamma, beta):
    """Pure-JAX (f32) reference mirroring the PyTorch module."""
    y = lax.conv_general_dilated(
        x_nchw, w_oihw, window_strides=(1, 1), padding="SAME",
        dimension_numbers=("NCHW", "OIHW", "NCHW"))
    y = y + bias[None, :, None, None]
    mean = jnp.mean(y, axis=(0, 2, 3), keepdims=True)
    var = jnp.mean((y - mean) ** 2, axis=(0, 2, 3), keepdims=True)
    y = (y - mean) / jnp.sqrt(var + 1e-5)
    y = y * gamma[None, :, None, None] + beta[None, :, None, None]
    return jnp.where(y >= 0, y, 0.2 * y)


if __name__ == "__main__":
    # Shapes consistent with CNOBlock(in_channels=4, out_channels=4, in_size=(16,16),
    # out_size=(16,16), conv_kernel=3, batch_norm=True)
    B, Cin, Cout, H, W = 2, 4, 4, 16, 16

    key = jax.random.PRNGKey(0)
    kx, kw, kb, kg, kbe = jax.random.split(key, 5)

    x = jax.random.normal(kx, (B, Cin, H, W), dtype=jnp.float32)
    w = jax.random.normal(kw, (Cout, Cin, 3, 3), dtype=jnp.float32) * 0.1   # OIHW
    b = jax.random.normal(kb, (Cout,), dtype=jnp.float32) * 0.1
    gamma = 1.0 + 0.1 * jax.random.normal(kg, (Cout,), dtype=jnp.float32)
    beta = 0.1 * jax.random.normal(kbe, (Cout,), dtype=jnp.float32)

    out = cno_block_forward(x, w, b, gamma, beta)
    out = jax.block_until_ready(out)

    ref = reference_forward(x, w, b, gamma, beta)
    assert out.shape == (B, Cout, H, W)
    # Tolerance sized for bf16 MXU operands (f32 accumulation / BN statistics).
    err = float(jnp.max(jnp.abs(out - ref)))
    assert jnp.allclose(out, ref, atol=2e-2, rtol=2e-2), err

    print("KERNEL_OK")
</pallas_src>

<mosaic_0001>
module attributes {stable_mosaic.version = 11 : i64} {
  func.func @bn_lrelu_kernel(%arg0: i32, %arg1: memref<1x4x256xf32, #tpu.memory_space<vmem>>, %arg2: memref<2x4x1xf32, #tpu.memory_space<vmem>>, %arg3: memref<2x4x1xf32, #tpu.memory_space<vmem>>, %arg4: memref<4x1xf32, #tpu.memory_space<vmem>>, %arg5: memref<4x1xf32, #tpu.memory_space<vmem>>, %arg6: memref<1x4x256xf32, #tpu.memory_space<vmem>>) attributes {dimension_semantics = [#tpu.dimension_semantics<parallel>], iteration_bounds = array<i64: 2>, scalar_prefetch = 0 : i64, scratch_operands = 0 : i64, tpu.core_type = #tpu.core_type<tc>, window_params = [{transform_indices = @transform_0, window_bounds = array<i64: 1, 4, 256>}, {pipeline_mode = #tpu.pipeline_mode<synchronous>, transform_indices = @transform_1, window_bounds = array<i64: 2, 4, 1>}, {pipeline_mode = #tpu.pipeline_mode<synchronous>, transform_indices = @transform_2, window_bounds = array<i64: 2, 4, 1>}, {pipeline_mode = #tpu.pipeline_mode<synchronous>, transform_indices = @transform_3, window_bounds = array<i64: 4, 1>}, {pipeline_mode = #tpu.pipeline_mode<synchronous>, transform_indices = @transform_4, window_bounds = array<i64: 4, 1>}, {transform_indices = @transform_5, window_bounds = array<i64: 1, 4, 256>}]} {
    %c0 = arith.constant 0 : index
    %c0_0 = arith.constant 0 : index
    %c0_1 = arith.constant 0 : index
    %0 = vector.load %arg2[%c0, %c0_0, %c0_1] : memref<2x4x1xf32, #tpu.memory_space<vmem>>, vector<2x4x1xf32>
    %cst = arith.constant dense<0.000000e+00> : vector<4x1xf32>
    %1 = vector.multi_reduction <add>, %0, %cst [0] : vector<2x4x1xf32> to vector<4x1xf32>
    %cst_2 = arith.constant 0.001953125 : f32
    %2 = vector.broadcast %cst_2 : f32 to vector<4x1xf32>
    %3 = arith.mulf %1, %2 : vector<4x1xf32>
    %c0_3 = arith.constant 0 : index
    %c0_4 = arith.constant 0 : index
    %c0_5 = arith.constant 0 : index
    %4 = vector.load %arg3[%c0_3, %c0_4, %c0_5] : memref<2x4x1xf32, #tpu.memory_space<vmem>>, vector<2x4x1xf32>
    %cst_6 = arith.constant dense<0.000000e+00> : vector<4x1xf32>
    %5 = vector.multi_reduction <add>, %4, %cst_6 [0] : vector<2x4x1xf32> to vector<4x1xf32>
    %cst_7 = arith.constant 0.001953125 : f32
    %6 = vector.broadcast %cst_7 : f32 to vector<4x1xf32>
    %7 = arith.mulf %5, %6 : vector<4x1xf32>
    %8 = arith.mulf %3, %3 : vector<4x1xf32>
    %9 = arith.subf %7, %8 : vector<4x1xf32>
    %cst_8 = arith.constant 9.99999974E-6 : f32
    %10 = vector.broadcast %cst_8 : f32 to vector<4x1xf32>
    %11 = arith.addf %9, %10 : vector<4x1xf32>
    %12 = math.rsqrt %11 : vector<4x1xf32>
    %c0_9 = arith.constant 0 : index
    %c0_10 = arith.constant 0 : index
    %13 = vector.load %arg4[%c0_9, %c0_10] : memref<4x1xf32, #tpu.memory_space<vmem>>, vector<4x1xf32>
    %14 = arith.mulf %13, %12 : vector<4x1xf32>
    %c0_11 = arith.constant 0 : index
    %c0_12 = arith.constant 0 : index
    %15 = vector.load %arg5[%c0_11, %c0_12] : memref<4x1xf32, #tpu.memory_space<vmem>>, vector<4x1xf32>
    %16 = arith.mulf %3, %14 : vector<4x1xf32>
    %17 = arith.subf %15, %16 : vector<4x1xf32>
    %c0_13 = arith.constant 0 : index
    %c0_14 = arith.constant 0 : index
    %c0_15 = arith.constant 0 : index
    %18 = vector.load %arg1[%c0_13, %c0_14, %c0_15] : memref<1x4x256xf32, #tpu.memory_space<vmem>>, vector<1x4x256xf32>
    %19 = vector.shape_cast %18 : vector<1x4x256xf32> to vector<4x256xf32>
    %20 = vector.broadcast %14 : vector<4x1xf32> to vector<4x256xf32>
    %21 = arith.mulf %19, %20 : vector<4x256xf32>
    %22 = vector.broadcast %17 : vector<4x1xf32> to vector<4x256xf32>
    %23 = arith.addf %21, %22 : vector<4x256xf32>
    %cst_16 = arith.constant 0.000000e+00 : f32
    %24 = vector.broadcast %cst_16 : f32 to vector<4x256xf32>
    %25 = arith.cmpf oge, %23, %24 : vector<4x256xf32>
    %cst_17 = arith.constant 2.000000e-01 : f32
    %26 = vector.broadcast %cst_17 : f32 to vector<4x256xf32>
    %27 = arith.mulf %26, %23 : vector<4x256xf32>
    %28 = arith.select %25, %23, %27 : vector<4x256xi1>, vector<4x256xf32>
    %c0_18 = arith.constant 0 : index
    %c0_19 = arith.constant 0 : index
    %c0_20 = arith.constant 0 : index
    %29 = vector.load %arg6[%c0_18, %c0_19, %c0_20] : memref<1x4x256xf32, #tpu.memory_space<vmem>>, vector<1x4x256xf32>
    %30 = vector.shape_cast %29 : vector<1x4x256xf32> to vector<4x256xf32>
    %31 = vector.shape_cast %28 : vector<4x256xf32> to vector<1x4x256xf32>
    tpu.vector_store %arg6[%c0_18, %c0_19, %c0_20], %31 {strides = array<i32>} : memref<1x4x256xf32, #tpu.memory_space<vmem>>, vector<1x4x256xf32>,
    return
  }
  func.func @transform_0(%arg0: i32) -> (i32, i32, i32) {
    %c0_i32 = arith.constant 0 : i32
    %c0_i32_0 = arith.constant 0 : i32
    %c0_i32_1 = arith.constant 0 : i32
    return %arg0, %c0_i32, %c0_i32_0 : i32, i32, i32
  }
  func.func @transform_1(%arg0: i32) -> (i32, i32, i32) {
    %c0_i32 = arith.constant 0 : i32
    %c0_i32_0 = arith.constant 0 : i32
    %c0_i32_1 = arith.constant 0 : i32
    %c0_i32_2 = arith.constant 0 : i32
    return %c0_i32, %c0_i32_0, %c0_i32_1 : i32, i32, i32
  }
  func.func @transform_2(%arg0: i32) -> (i32, i32, i32) {
    %c0_i32 = arith.constant 0 : i32
    %c0_i32_0 = arith.constant 0 : i32
    %c0_i32_1 = arith.constant 0 : i32
    %c0_i32_2 = arith.constant 0 : i32
    return %c0_i32, %c0_i32_0, %c0_i32_1 : i32, i32, i32
  }
  func.func @transform_3(%arg0: i32) -> (i32, i32) {
    %c0_i32 = arith.constant 0 : i32
    %c0_i32_0 = arith.constant 0 : i32
    %c0_i32_1 = arith.constant 0 : i32
    return %c0_i32, %c0_i32_0 : i32, i32
  }
  func.func @transform_4(%arg0: i32) -> (i32, i32) {
    %c0_i32 = arith.constant 0 : i32
    %c0_i32_0 = arith.constant 0 : i32
    %c0_i32_1 = arith.constant 0 : i32
    return %c0_i32, %c0_i32_0 : i32, i32
  }
  func.func @transform_5(%arg0: i32) -> (i32, i32, i32) {
    %c0_i32 = arith.constant 0 : i32
    %c0_i32_0 = arith.constant 0 : i32
    %c0_i32_1 = arith.constant 0 : i32
    return %arg0, %c0_i32, %c0_i32_0 : i32, i32, i32
  }
}

module attributes {stable_mosaic.version = 11 : i64} {
  func.func @conv_stats_kernel(%arg0: i32, %arg1: memref<1x4x290xf32, #tpu.memory_space<vmem>>, %arg2: memref<4x36xbf16, #tpu.memory_space<vmem>>, %arg3: memref<4x1xf32, #tpu.memory_space<vmem>>, %arg4: memref<1x4x256xf32, #tpu.memory_space<vmem>>, %arg5: memref<1x4x1xf32, #tpu.memory_space<vmem>>, %arg6: memref<1x4x1xf32, #tpu.memory_space<vmem>>) attributes {dimension_semantics = [#tpu.dimension_semantics<parallel>], iteration_bounds = array<i64: 2>, scalar_prefetch = 0 : i64, scratch_operands = 0 : i64, tpu.core_type = #tpu.core_type<tc>, window_params = [{transform_indices = @transform_0, window_bounds = array<i64: 1, 4, 290>}, {pipeline_mode = #tpu.pipeline_mode<synchronous>, transform_indices = @transform_1, window_bounds = array<i64: 4, 36>}, {pipeline_mode = #tpu.pipeline_mode<synchronous>, transform_indices = @transform_2, window_bounds = array<i64: 4, 1>}, {transform_indices = @transform_3, window_bounds = array<i64: 1, 4, 256>}, {transform_indices = @transform_4, window_bounds = array<i64: 1, 4, 1>}, {transform_indices = @transform_5, window_bounds = array<i64: 1, 4, 1>}]} {
    %c0 = arith.constant 0 : index
    %c0_0 = arith.constant 0 : index
    %c0_1 = arith.constant 0 : index
    %0 = vector.load %arg1[%c0, %c0_0, %c0_1] : memref<1x4x290xf32, #tpu.memory_space<vmem>>, vector<1x4x290xf32>
    %1 = vector.shape_cast %0 : vector<1x4x290xf32> to vector<4x290xf32>
    %2 = tpu.iota {dimensions = array<i32: 1>} : vector<1x256xi32>
    %c16_i32 = arith.constant 16 : i32
    %c0_i32 = arith.constant 0 : i32
    %3 = arith.cmpi eq, %c16_i32, %c0_i32 : i32
    %c1_i32 = arith.constant 1 : i32
    %4 = arith.select %3, %c1_i32, %c16_i32 : i32
    %5 = vector.broadcast %4 : i32 to vector<1x256xi32>
    %6 = arith.remsi %2, %5 : vector<1x256xi32>
    %c0_i32_2 = arith.constant 0 : i32
    %7 = vector.broadcast %c0_i32_2 : i32 to vector<1x256xi32>
    %8 = arith.cmpi ne, %6, %7 : vector<1x256xi32>
    %c0_i32_3 = arith.constant 0 : i32
    %9 = vector.broadcast %c0_i32_3 : i32 to vector<1x256xi32>
    %10 = arith.cmpi slt, %6, %9 : vector<1x256xi32>
    %c0_i32_4 = arith.constant 0 : i32
    %11 = arith.cmpi slt, %4, %c0_i32_4 : i32
    %12 = vector.broadcast %11 : i1 to vector<1x256xi1>
    %13 = vector.broadcast %12 : vector<1x256xi1> to vector<1x256xi1>
    %14 = arith.xori %10, %13 : vector<1x256xi1>
    %15 = arith.andi %14, %8 : vector<1x256xi1>
    %16 = vector.broadcast %4 : i32 to vector<1x256xi32>
    %17 = arith.addi %6, %16 : vector<1x256xi32>
    %18 = arith.select %15, %17, %6 : vector<1x256xi1>, vector<1x256xi32>
    %19 = vector.extract_strided_slice %1 {offsets = [0, 0], sizes = [4, 256], strides = [1, 1]} : vector<4x290xf32> to vector<4x256xf32>
    %c0_i32_5 = arith.constant 0 : i32
    %20 = vector.broadcast %c0_i32_5 : i32 to vector<1x256xi32>
    %21 = arith.cmpi ne, %18, %20 : vector<1x256xi32>
    %cst = arith.constant 0.000000e+00 : f32
    %22 = vector.shape_cast %21 : vector<1x256xi1> to vector<1x256xi1>
    %23 = vector.broadcast %22 : vector<1x256xi1> to vector<4x256xi1>
    %24 = vector.broadcast %cst : f32 to vector<4x256xf32>
    %25 = arith.select %23, %19, %24 : vector<4x256xi1>, vector<4x256xf32>
    %26 = arith.truncf %25 : vector<4x256xf32> to vector<4x256xbf16>
    %27 = vector.extract_strided_slice %1 {offsets = [0, 1], sizes = [4, 256], strides = [1, 1]} : vector<4x290xf32> to vector<4x256xf32>
    %28 = arith.truncf %27 : vector<4x256xf32> to vector<4x256xbf16>
    %29 = vector.extract_strided_slice %1 {offsets = [0, 2], sizes = [4, 256], strides = [1, 1]} : vector<4x290xf32> to vector<4x256xf32>
    %c15_i32 = arith.constant 15 : i32
    %30 = vector.broadcast %c15_i32 : i32 to vector<1x256xi32>
    %31 = arith.cmpi ne, %18, %30 : vector<1x256xi32>
    %cst_6 = arith.constant 0.000000e+00 : f32
    %32 = vector.shape_cast %31 : vector<1x256xi1> to vector<1x256xi1>
    %33 = vector.broadcast %32 : vector<1x256xi1> to vector<4x256xi1>
    %34 = vector.broadcast %cst_6 : f32 to vector<4x256xf32>
    %35 = arith.select %33, %29, %34 : vector<4x256xi1>, vector<4x256xf32>
    %36 = arith.truncf %35 : vector<4x256xf32> to vector<4x256xbf16>
    %37 = vector.extract_strided_slice %1 {offsets = [0, 16], sizes = [4, 256], strides = [1, 1]} : vector<4x290xf32> to vector<4x256xf32>
    %c0_i32_7 = arith.constant 0 : i32
    %38 = vector.broadcast %c0_i32_7 : i32 to vector<1x256xi32>
    %39 = arith.cmpi ne, %18, %38 : vector<1x256xi32>
    %cst_8 = arith.constant 0.000000e+00 : f32
    %40 = vector.shape_cast %39 : vector<1x256xi1> to vector<1x256xi1>
    %41 = vector.broadcast %40 : vector<1x256xi1> to vector<4x256xi1>
    %42 = vector.broadcast %cst_8 : f32 to vector<4x256xf32>
    %43 = arith.select %41, %37, %42 : vector<4x256xi1>, vector<4x256xf32>
    %44 = arith.truncf %43 : vector<4x256xf32> to vector<4x256xbf16>
    %45 = vector.extract_strided_slice %1 {offsets = [0, 17], sizes = [4, 256], strides = [1, 1]} : vector<4x290xf32> to vector<4x256xf32>
    %46 = arith.truncf %45 : vector<4x256xf32> to vector<4x256xbf16>
    %47 = vector.extract_strided_slice %1 {offsets = [0, 18], sizes = [4, 256], strides = [1, 1]} : vector<4x290xf32> to vector<4x256xf32>
    %c15_i32_9 = arith.constant 15 : i32
    %48 = vector.broadcast %c15_i32_9 : i32 to vector<1x256xi32>
    %49 = arith.cmpi ne, %18, %48 : vector<1x256xi32>
    %cst_10 = arith.constant 0.000000e+00 : f32
    %50 = vector.shape_cast %49 : vector<1x256xi1> to vector<1x256xi1>
    %51 = vector.broadcast %50 : vector<1x256xi1> to vector<4x256xi1>
    %52 = vector.broadcast %cst_10 : f32 to vector<4x256xf32>
    %53 = arith.select %51, %47, %52 : vector<4x256xi1>, vector<4x256xf32>
    %54 = arith.truncf %53 : vector<4x256xf32> to vector<4x256xbf16>
    %55 = vector.extract_strided_slice %1 {offsets = [0, 32], sizes = [4, 256], strides = [1, 1]} : vector<4x290xf32> to vector<4x256xf32>
    %c0_i32_11 = arith.constant 0 : i32
    %56 = vector.broadcast %c0_i32_11 : i32 to vector<1x256xi32>
    %57 = arith.cmpi ne, %18, %56 : vector<1x256xi32>
    %cst_12 = arith.constant 0.000000e+00 : f32
    %58 = vector.shape_cast %57 : vector<1x256xi1> to vector<1x256xi1>
    %59 = vector.broadcast %58 : vector<1x256xi1> to vector<4x256xi1>
    %60 = vector.broadcast %cst_12 : f32 to vector<4x256xf32>
    %61 = arith.select %59, %55, %60 : vector<4x256xi1>, vector<4x256xf32>
    %62 = arith.truncf %61 : vector<4x256xf32> to vector<4x256xbf16>
    %63 = vector.extract_strided_slice %1 {offsets = [0, 33], sizes = [4, 256], strides = [1, 1]} : vector<4x290xf32> to vector<4x256xf32>
    %64 = arith.truncf %63 : vector<4x256xf32> to vector<4x256xbf16>
    %65 = vector.extract_strided_slice %1 {offsets = [0, 34], sizes = [4, 256], strides = [1, 1]} : vector<4x290xf32> to vector<4x256xf32>
    %c15_i32_13 = arith.constant 15 : i32
    %66 = vector.broadcast %c15_i32_13 : i32 to vector<1x256xi32>
    %67 = arith.cmpi ne, %18, %66 : vector<1x256xi32>
    %cst_14 = arith.constant 0.000000e+00 : f32
    %68 = vector.shape_cast %67 : vector<1x256xi1> to vector<1x256xi1>
    %69 = vector.broadcast %68 : vector<1x256xi1> to vector<4x256xi1>
    %70 = vector.broadcast %cst_14 : f32 to vector<4x256xf32>
    %71 = arith.select %69, %65, %70 : vector<4x256xi1>, vector<4x256xf32>
    %72 = arith.truncf %71 : vector<4x256xf32> to vector<4x256xbf16>
    %73 = tpu.concatenate %26, %28, %36, %44, %46, %54, %62, %64, %72 in 0 : vector<4x256xbf16>, vector<4x256xbf16>, vector<4x256xbf16>, vector<4x256xbf16>, vector<4x256xbf16>, vector<4x256xbf16>, vector<4x256xbf16>, vector<4x256xbf16>, vector<4x256xbf16> -> vector<36x256xbf16>
    %c0_15 = arith.constant 0 : index
    %c0_16 = arith.constant 0 : index
    %74 = vector.load %arg2[%c0_15, %c0_16] : memref<4x36xbf16, #tpu.memory_space<vmem>>, vector<4x36xbf16>
    %cst_17 = arith.constant dense<0.000000e+00> : vector<4x256xf32>
    %75 = tpu.matmul %74, %73, %cst_17 {dimension_numbers = #tpu.dot_dimension_numbers<[1], [0], [0], [1], [0, 0, 1, 1], [], []>} : vector<4x36xbf16>, vector<36x256xbf16>, vector<4x256xf32> -> vector<4x256xf32>
    %c0_18 = arith.constant 0 : index
    %c0_19 = arith.constant 0 : index
    %76 = vector.load %arg3[%c0_18, %c0_19] : memref<4x1xf32, #tpu.memory_space<vmem>>, vector<4x1xf32>
    %77 = vector.broadcast %76 : vector<4x1xf32> to vector<4x256xf32>
    %78 = arith.addf %75, %77 : vector<4x256xf32>
    %c0_20 = arith.constant 0 : index
    %c0_21 = arith.constant 0 : index
    %c0_22 = arith.constant 0 : index
    %79 = vector.load %arg4[%c0_20, %c0_21, %c0_22] : memref<1x4x256xf32, #tpu.memory_space<vmem>>, vector<1x4x256xf32>
    %80 = vector.shape_cast %79 : vector<1x4x256xf32> to vector<4x256xf32>
    %81 = vector.shape_cast %78 : vector<4x256xf32> to vector<1x4x256xf32>
    tpu.vector_store %arg4[%c0_20, %c0_21, %c0_22], %81 {strides = array<i32>} : memref<1x4x256xf32, #tpu.memory_space<vmem>>, vector<1x4x256xf32>,
    %cst_23 = arith.constant dense<0.000000e+00> : vector<4xf32>
    %82 = vector.multi_reduction <add>, %78, %cst_23 [1] : vector<4x256xf32> to vector<4xf32>
    %83 = vector.shape_cast %82 : vector<4xf32> to vector<4x1xf32>
    %c0_24 = arith.constant 0 : index
    %c0_25 = arith.constant 0 : index
    %c0_26 = arith.constant 0 : index
    %84 = vector.load %arg5[%c0_24, %c0_25, %c0_26] : memref<1x4x1xf32, #tpu.memory_space<vmem>>, vector<1x4x1xf32>
    %85 = vector.shape_cast %84 : vector<1x4x1xf32> to vector<4x1xf32>
    %86 = vector.shape_cast %83 : vector<4x1xf32> to vector<1x4x1xf32>
    tpu.vector_store %arg5[%c0_24, %c0_25, %c0_26], %86 {strides = array<i32>} : memref<1x4x1xf32, #tpu.memory_space<vmem>>, vector<1x4x1xf32>,
    %87 = arith.mulf %78, %78 : vector<4x256xf32>
    %cst_27 = arith.constant dense<0.000000e+00> : vector<4xf32>
    %88 = vector.multi_reduction <add>, %87, %cst_27 [1] : vector<4x256xf32> to vector<4xf32>
    %89 = vector.shape_cast %88 : vector<4xf32> to vector<4x1xf32>
    %c0_28 = arith.constant 0 : index
    %c0_29 = arith.constant 0 : index
    %c0_30 = arith.constant 0 : index
    %90 = vector.load %arg6[%c0_28, %c0_29, %c0_30] : memref<1x4x1xf32, #tpu.memory_space<vmem>>, vector<1x4x1xf32>
    %91 = vector.shape_cast %90 : vector<1x4x1xf32> to vector<4x1xf32>
    %92 = vector.shape_cast %89 : vector<4x1xf32> to vector<1x4x1xf32>
    tpu.vector_store %arg6[%c0_28, %c0_29, %c0_30], %92 {strides = array<i32>} : memref<1x4x1xf32, #tpu.memory_space<vmem>>, vector<1x4x1xf32>,
    return
  }
  func.func @transform_0(%arg0: i32) -> (i32, i32, i32) {
    %c0_i32 = arith.constant 0 : i32
    %c0_i32_0 = arith.constant 0 : i32
    %c0_i32_1 = arith.constant 0 : i32
    return %arg0, %c0_i32, %c0_i32_0 : i32, i32, i32
  }
  func.func @transform_1(%arg0: i32) -> (i32, i32) {
    %c0_i32 = arith.constant 0 : i32
    %c0_i32_0 = arith.constant 0 : i32
    %c0_i32_1 = arith.constant 0 : i32
    return %c0_i32, %c0_i32_0 : i32, i32
  }
  func.func @transform_2(%arg0: i32) -> (i32, i32) {
    %c0_i32 = arith.constant 0 : i32
    %c0_i32_0 = arith.constant 0 : i32
    %c0_i32_1 = arith.constant 0 : i32
    return %c0_i32, %c0_i32_0 : i32, i32
  }
  func.func @transform_3(%arg0: i32) -> (i32, i32, i32) {
    %c0_i32 = arith.constant 0 : i32
    %c0_i32_0 = arith.constant 0 : i32
    %c0_i32_1 = arith.constant 0 : i32
    return %arg0, %c0_i32, %c0_i32_0 : i32, i32, i32
  }
  func.func @transform_4(%arg0: i32) -> (i32, i32, i32) {
    %c0_i32 = arith.constant 0 : i32
    %c0_i32_0 = arith.constant 0 : i32
    %c0_i32_1 = arith.constant 0 : i32
    return %arg0, %c0_i32, %c0_i32_0 : i32, i32, i32
  }
  func.func @transform_5(%arg0: i32) -> (i32, i32, i32) {
    %c0_i32 = arith.constant 0 : i32
    %c0_i32_0 = arith.constant 0 : i32
    %c0_i32_1 = arith.constant 0 : i32
    return %arg0, %c0_i32, %c0_i32_0 : i32, i32, i32
  }
}

</mosaic_0001>

<llo_original>
// kernel: cno_block_forward.3
$region0: #{cno_block_forward.3}
  #allocation0 [shape = 'u32[]', space=smem, size = 0x4, offset = 0x4, fixed_abs, tag = 'smem constant byte address 0x4 - core index']
  #allocation1 [shape = 'u32[72,128]{1,0:T(1,128)}', space=vmem, size = 0x9000, scoped, tag = 'internal scratch']
  %s0 = inlined_call_operand.vmem [shape: f32[2,4,256], index: 0, kind: input, shape index: {}]
  %s1 = inlined_call_operand.vmem [shape: f32[2,4,1], index: 1, kind: input, shape index: {}]
  %s2 = inlined_call_operand.vmem [shape: f32[2,4,1], index: 2, kind: input, shape index: {}]
  %s3 = inlined_call_operand.vmem [shape: f32[4,1], index: 3, kind: input, shape index: {}]
  %s4 = inlined_call_operand.vmem [shape: f32[4,1], index: 4, kind: input, shape index: {}]
  %s5 = inlined_call_operand.vmem [shape: f32[2,4,256], index: 5, kind: output, shape index: {}]
  %s6 = sld [smem:[#allocation0]]
  $region53: #{cno_block_forward.3} parent=0
    _
  %s8 = ssub.s32 1, %s6
  %s9 = scalar_select 0, %s8, %s6
  loop: start=0, step=1, limit=4
  $region2: #{cno_block_forward.3} parent=0 // loop_pre_header
    _
  $region3: #{cno_block_forward.3} parent=0 // loop_header
    %s11 = sphi 0, %s15
    %p12 = scmp.ge.s32.totalorder %s11, 4
    %s21 = sphi 0, %s23
    %s24 = sphi 0, %s21
    %s25 = sphi 0, %s24
    %s41 = sphi 0, %s25
    %s45 = sphi 0, %s45
    %s47 = sphi 0, %s45
    %s48 = sphi 0, %s47
    %s62 = sphi 0, %s48
    %s66 = sphi 0, %s66
    %s68 = sphi 0, %s66
    %s69 = sphi 0, %s68
    %s83 = sphi 0, %s69
    %s87 = sphi 0, %s87
    %s89 = sphi 0, %s87
    %s90 = sphi 0, %s89
    %s104 = sphi 0, %s90
    %s108 = sphi 0, %s108
    %s110 = sphi 0, %s108
    %s111 = sphi 0, %s110
    %s125 = sphi 0, %s111
    %s131 = sphi 0, %s133
    %s134 = sphi 0, %s131
    %s135 = sphi 0, %s134
    %s151 = sphi 0, %s135
  $region4: #{cno_block_forward.3} parent=0 // loop_header_branch
    %14 = sbr.rel (%p12) target = $region8
  $region5: #{cno_block_forward.3} parent=0 // loop_body
    %s16 = ssub.s32 %s11, 1
    %s17 = ssub.s32 %s11, 2
    %s18 = sadd.s32 %s11, 1
    %s19 = ssub.s32 %s11, %s18
    %p20 = scmp.eq.s32.totalorder %s19, 0
    %s22 = sadd.s32 %s21, 1
    %s23 = scalar_select %p20, %s21, %s22
    %p26 = pneg %p20
    %p27 = scmp.eq.s32.totalorder %s11, 1
    %p28 = por %p26, %p27
    %p29 = scmp.ne.s32.totalorder %s21, %s24
    %p30 = scmp.eq.s32.totalorder %s11, 0
    %p31 = por %p29, %p30
    %p32 = scmp.ne.s32.totalorder %s21, %s24
    %p33 = scmp.eq.s32.totalorder %s16, 1
    %p34 = por %p32, %p33
    %p35 = scmp.ne.s32.totalorder %s24, %s25
    %p36 = scmp.eq.s32.totalorder %s16, 0
    %p37 = por %p35, %p36
    %p38 = scmp.ne.s32.totalorder %s24, %s25
    %p39 = scmp.eq.s32.totalorder %s17, 1
    %p40 = por %p38, %p39
    %p42 = scmp.ne.s32.totalorder %s25, %s41
    %p43 = scmp.eq.s32.totalorder %s17, 0
    %p44 = por %p42, %p43
    %s46 = sadd.s32 %s45, 1
    %p49 = scmp.eq.s32.totalorder %s11, 1
    %p50 = scmp.ne.s32.totalorder %s45, %s47
    %p51 = scmp.eq.s32.totalorder %s11, 0
    %p52 = por %p50, %p51
    %p53 = scmp.ne.s32.totalorder %s45, %s47
    %p54 = scmp.eq.s32.totalorder %s16, 1
    %p55 = por %p53, %p54
    %p56 = scmp.ne.s32.totalorder %s47, %s48
    %p57 = scmp.eq.s32.totalorder %s16, 0
    %p58 = por %p56, %p57
    %p59 = scmp.ne.s32.totalorder %s47, %s48
    %p60 = scmp.eq.s32.totalorder %s17, 1
    %p61 = por %p59, %p60
    %p63 = scmp.ne.s32.totalorder %s48, %s62
    %p64 = scmp.eq.s32.totalorder %s17, 0
    %p65 = por %p63, %p64
    %s67 = sadd.s32 %s66, 1
    %p70 = scmp.eq.s32.totalorder %s11, 1
    %p71 = scmp.ne.s32.totalorder %s66, %s68
    %p72 = scmp.eq.s32.totalorder %s11, 0
    %p73 = por %p71, %p72
    %p74 = scmp.ne.s32.totalorder %s66, %s68
    %p75 = scmp.eq.s32.totalorder %s16, 1
    %p76 = por %p74, %p75
    %p77 = scmp.ne.s32.totalorder %s68, %s69
    %p78 = scmp.eq.s32.totalorder %s16, 0
    %p79 = por %p77, %p78
    %p80 = scmp.ne.s32.totalorder %s68, %s69
    %p81 = scmp.eq.s32.totalorder %s17, 1
    %p82 = por %p80, %p81
    %p84 = scmp.ne.s32.totalorder %s69, %s83
    %p85 = scmp.eq.s32.totalorder %s17, 0
    %p86 = por %p84, %p85
    %s88 = sadd.s32 %s87, 1
    %p91 = scmp.eq.s32.totalorder %s11, 1
    %p92 = scmp.ne.s32.totalorder %s87, %s89
    %p93 = scmp.eq.s32.totalorder %s11, 0
    %p94 = por %p92, %p93
    %p95 = scmp.ne.s32.totalorder %s87, %s89
    %p96 = scmp.eq.s32.totalorder %s16, 1
    %p97 = por %p95, %p96
    %p98 = scmp.ne.s32.totalorder %s89, %s90
    %p99 = scmp.eq.s32.totalorder %s16, 0
    %p100 = por %p98, %p99
    %p101 = scmp.ne.s32.totalorder %s89, %s90
    %p102 = scmp.eq.s32.totalorder %s17, 1
    %p103 = por %p101, %p102
    %p105 = scmp.ne.s32.totalorder %s90, %s104
    %p106 = scmp.eq.s32.totalorder %s17, 0
    %p107 = por %p105, %p106
    %s109 = sadd.s32 %s108, 1
    %p112 = scmp.eq.s32.totalorder %s11, 1
    %p113 = scmp.ne.s32.totalorder %s108, %s110
    %p114 = scmp.eq.s32.totalorder %s11, 0
    %p115 = por %p113, %p114
    %p116 = scmp.ne.s32.totalorder %s108, %s110
    %p117 = scmp.eq.s32.totalorder %s16, 1
    %p118 = por %p116, %p117
    %p119 = scmp.ne.s32.totalorder %s110, %s111
    %p120 = scmp.eq.s32.totalorder %s16, 0
    %p121 = por %p119, %p120
    %p122 = scmp.ne.s32.totalorder %s110, %s111
    %p123 = scmp.eq.s32.totalorder %s17, 1
    %p124 = por %p122, %p123
    %p126 = scmp.ne.s32.totalorder %s111, %s125
    %p127 = scmp.eq.s32.totalorder %s17, 0
    %p128 = por %p126, %p127
    %s129 = ssub.s32 %s11, %s18
    %p130 = scmp.eq.s32.totalorder %s129, 0
    %s132 = sadd.s32 %s131, 1
    %s133 = scalar_select %p130, %s131, %s132
    %p136 = pneg %p130
    %p137 = scmp.eq.s32.totalorder %s11, 1
    %p138 = por %p136, %p137
    %p139 = scmp.ne.s32.totalorder %s131, %s134
    %p140 = scmp.eq.s32.totalorder %s11, 0
    %p141 = por %p139, %p140
    %p142 = scmp.ne.s32.totalorder %s131, %s134
    %p143 = scmp.eq.s32.totalorder %s16, 1
    %p144 = por %p142, %p143
    %p145 = scmp.ne.s32.totalorder %s134, %s135
    %p146 = scmp.eq.s32.totalorder %s16, 0
    %p147 = por %p145, %p146
    %p148 = scmp.ne.s32.totalorder %s134, %s135
    %p149 = scmp.eq.s32.totalorder %s17, 1
    %p150 = por %p148, %p149
    %p152 = scmp.ne.s32.totalorder %s135, %s151
    %p153 = scmp.eq.s32.totalorder %s17, 0
    %p154 = por %p152, %p153
    %p155 = scmp.le.s32.totalorder 1, %s11
    %p156 = scmp.lt.s32.totalorder %s11, 3
    %p157 = pnand %p155, %p156
    %p158 = pneg %p157
    // Predicated region
    $region9: #{cno_block_forward.3} parent=5 // pred_check
      _
    $region10: #{cno_block_forward.3} parent=5 // pred_check_branch
      %160 = sbr.rel (%p157) target = $region12
    $region11: #{cno_block_forward.3} parent=5 // pred_region
      %s161 = ssub.s32 %s11, 1
      // Predicated region
      $region13: #{cno_block_forward.3} parent=11 // pred_check
        %p162 = pneg %p58
      $region14: #{cno_block_forward.3} parent=11 // pred_check_branch
        %164 = sbr.rel (%p162) target = $region16
      $region15: #{cno_block_forward.3} parent=11 // pred_region
        _
      $region16: #{cno_block_forward.3} parent=11 // pred_fallthru
        _
      // Predicated region
      $region17: #{cno_block_forward.3} parent=11 // pred_check
        %p165 = pneg %p79
      $region18: #{cno_block_forward.3} parent=11 // pred_check_branch
        %167 = sbr.rel (%p165) target = $region20
      $region19: #{cno_block_forward.3} parent=11 // pred_region
        _
      $region20: #{cno_block_forward.3} parent=11 // pred_fallthru
        _
      // Predicated region
      $region21: #{cno_block_forward.3} parent=11 // pred_check
        %p168 = pneg %p100
      $region22: #{cno_block_forward.3} parent=11 // pred_check_branch
        %170 = sbr.rel (%p168) target = $region24
      $region23: #{cno_block_forward.3} parent=11 // pred_region
        _
      $region24: #{cno_block_forward.3} parent=11 // pred_fallthru
        _
      // Predicated region
      $region25: #{cno_block_forward.3} parent=11 // pred_check
        %p171 = pneg %p121
      $region26: #{cno_block_forward.3} parent=11 // pred_check_branch
        %173 = sbr.rel (%p171) target = $region28
      $region27: #{cno_block_forward.3} parent=11 // pred_region
        _
      $region28: #{cno_block_forward.3} parent=11 // pred_fallthru
        _
    $region12: #{cno_block_forward.3} parent=5 // pred_fallthru
      _
    %p174 = scmp.lt.s32.totalorder %s11, 2
    // Predicated region
    $region29: #{cno_block_forward.3} parent=5 // pred_check
      %p175 = pneg %p174
    $region30: #{cno_block_forward.3} parent=5 // pred_check_branch
      %177 = sbr.rel (%p175) target = $region32
    $region31: #{cno_block_forward.3} parent=5 // pred_region
      // Predicated region
      $region33: #{cno_block_forward.3} parent=31 // pred_check
        %p178 = pneg %p31
      $region34: #{cno_block_forward.3} parent=31 // pred_check_branch
        %180 = sbr.rel (%p178) target = $region36
      $region35: #{cno_block_forward.3} parent=31 // pred_region
        %p181 = scmp.lt.s32.totalorder %s11, 1
        %s182 = scalar_select %p181, %s11, 1
        %s183 = smul.addr %s182, 2
        %s184 = smul.addr %s183, 4
        %s185 = scalar_lea.vmem %s0, %s184
      $region36: #{cno_block_forward.3} parent=31 // pred_fallthru
        _
    $region32: #{cno_block_forward.3} parent=5 // pred_fallthru
      _
    %p186 = scmp.le.s32.totalorder 1, %s11
    %p187 = scmp.lt.s32.totalorder %s11, 3
    %p188 = pnand %p186, %p187
    %p189 = pneg %p188
    // Predicated region
    $region37: #{cno_block_forward.3} parent=5 // pred_check
      _
    $region38: #{cno_block_forward.3} parent=5 // pred_check_branch
      %191 = sbr.rel (%p188) target = $region40
    $region39: #{cno_block_forward.3} parent=5 // pred_region
      %s192 = ssub.s32 %s11, 1
      %p193 = scmp.lt.s32.totalorder %s16, 1
      %s194 = scalar_select %p193, %s16, 1
      %s195 = smul.addr %s194, 2
      %s196 = smul.addr %s195, 4
      %s197 = scalar_lea.vmem %s0, %s196
      %p198 = pneg %p37
      %p199 = pneg %p34
      %p200 = pneg %p58
      %p201 = pneg %p55
      %p202 = pneg %p79
      %p203 = pneg %p76
      %p204 = pneg %p100
      %p205 = pneg %p97
      %p206 = pneg %p121
      %p207 = pneg %p118
      %p208 = pneg %p147
      %p209 = pneg %p144
      %p210 = scmp.lt.s32.totalorder %s16, 1
      %s211 = scalar_select %p210, %s16, 1
      %s212 = smul.addr %s211, 2
      %s213 = smul.addr %s212, 4
      %s214 = scalar_lea.vmem %s5, %s213
      %p215 = scmp.lt.s32.totalorder %s16, 1
      %s216 = scalar_select %p215, %s16, 1
      %s217 = smul.addr %s216, 2
      %s218 = smul.addr %s217, 4
      %s219 = scalar_lea.vmem %s0, %s218
      %p220 = scmp.lt.s32.totalorder %s16, 1
      %s221 = scalar_select %p220, %s16, 1
      %s222 = smul.addr %s221, 2
      %s223 = smul.addr %s222, 4
      %s224 = scalar_lea.vmem %s5, %s223
      %v225 = vld [vmem:[%s1] sm:$0xf]
      %v226 = vld [vmem:[%s1 + $0x4] sm:$0xf]
      %vm227 = vcmask 3072
      %v228 = vsel %vm227, %v225, 0.0
      %v229 = vsel %vm227, %v226, 0.0
      %v230 = vadd.f32 %v228, %v229
      %v231 = vmul.f32 %v230, 0.001953125
      %v232 = vld [vmem:[%s2] sm:$0xf]
      %v233 = vld [vmem:[%s2 + $0x4] sm:$0xf]
      %v234 = vsel %vm227, %v232, 0.0
      %v235 = vsel %vm227, %v233, 0.0
      %v236 = vadd.f32 %v234, %v235
      %v237 = vmul.f32 %v236, 0.001953125
      %v238 = vmul.f32 %v231, %v231
      %v239 = vsub.f32 %v237, %v238
      %v240 = vadd.f32 %v239, 1e-05
      %v241 = vrsqrt.pop %v240
      %v242 = vmul.f32 %v241, %v240
      %v243 = vmul.f32 %v242, %v241
      %v244 = vmul.f32 0.5, %v243
      %v245 = vsub.f32 1.5, %v244
      %v246 = vmul.f32 %v241, %v245
      %vm247 = vweird.f32 %v240
      %vm248 = vweird.f32 %v241
      %vm249 = vmor %vm247, %vm248
      %v250 = vsel %vm249, %v241, %v246
      %v251 = vld [vmem:[%s3] sm:$0xf]
      %v252 = vmul.f32 %v251, %v250
      %v253 = vld [vmem:[%s4] sm:$0xf]
      %v254 = vmul.f32 %v231, %v252
      %v255 = vsub.f32 %v253, %v254
      %v256 = vld [vmem:[%s219] sm:$0xff]
      %258 = vset.pattern.permute.xlu0 0
      %259 = vperm.xlu0 %258, %v252
      %v260 = vpop.permute.xlu0 %259
      %v262 = vunpack.c.l.s4 839922192
      %v263 = vunpack.c.0.s8 %v262
      %v264 = vperm.slane %v260, %v263
      %v266 = vmul.f32 %v256, %v264
      %268 = vset.pattern.permute.xlu0 0
      %269 = vperm.xlu0 %268, %v255
      %v270 = vpop.permute.xlu0 %269
      %v272 = vunpack.c.l.s4 839922192
      %v273 = vunpack.c.0.s8 %v272
      %v274 = vperm.slane %v270, %v273
      %v276 = vadd.f32 %v266, %v274
      %vm277 = vcmp.ge.f32.partialorder %v276, 0.0
      %v278 = vmul.f32 %v276, 0.2
      %v279 = vsel %vm277, %v276, %v278
      %280 = vst [vmem:[%s224] sm:$0xff] %v279
      %p281 = scmp.lt.s32.totalorder %s16, 1
      %s282 = scalar_select %p281, %s16, 1
      %s283 = smul.addr %s282, 2
      %s284 = smul.addr %s283, 4
      %s285 = scalar_lea.vmem %s5, %s284
      // Predicated region
      $region41: #{cno_block_forward.3} parent=39 // pred_check
        %p286 = pneg %p144
      $region42: #{cno_block_forward.3} parent=39 // pred_check_branch
        %288 = sbr.rel (%p286) target = $region44
      $region43: #{cno_block_forward.3} parent=39 // pred_region
        _
      $region44: #{cno_block_forward.3} parent=39 // pred_fallthru
        _
    $region40: #{cno_block_forward.3} parent=5 // pred_fallthru
      _
    %p289 = scmp.le.s32.totalorder 2, %s11
    // Predicated region
    $region45: #{cno_block_forward.3} parent=5 // pred_check
      %p290 = pneg %p289
    $region46: #{cno_block_forward.3} parent=5 // pred_check_branch
      %292 = sbr.rel (%p290) target = $region48
    $region47: #{cno_block_forward.3} parent=5 // pred_region
      %s293 = ssub.s32 %s11, 2
      // Predicated region
      $region49: #{cno_block_forward.3} parent=47 // pred_check
        %p294 = pneg %p150
      $region50: #{cno_block_forward.3} parent=47 // pred_check_branch
        %296 = sbr.rel (%p294) target = $region52
      $region51: #{cno_block_forward.3} parent=47 // pred_region
        %p297 = scmp.lt.s32.totalorder %s17, 1
        %s298 = scalar_select %p297, %s17, 1
        %s299 = smul.addr %s298, 2
        %s300 = smul.addr %s299, 4
        %s301 = scalar_lea.vmem %s5, %s300
      $region52: #{cno_block_forward.3} parent=47 // pred_fallthru
        _
    $region48: #{cno_block_forward.3} parent=5 // pred_fallthru
      _
  $region6: #{cno_block_forward.3} parent=0 // loop_footer
    %s15 = sadd.s32 1, %s11
  $region7: #{cno_block_forward.3} parent=0 // loop_footer_branch
    %10 = sbr.rel target = $region3
  $region8: #{cno_block_forward.3} parent=0 // loop_exit
    _

// kernel: cno_block_forward.2
$region0: #{cno_block_forward.2}
  #allocation0 [shape = 'u32[]', space=smem, size = 0x4, offset = 0x4, fixed_abs, tag = 'smem constant byte address 0x4 - core index']
  #allocation1 [shape = 'u32[72,128]{1,0:T(1,128)}', space=vmem, size = 0x9000, scoped, tag = 'internal scratch']
  %s0 = inlined_call_operand.vmem [shape: f32[2,4,290], index: 0, kind: input, shape index: {}]
  %s1 = inlined_call_operand.vmem [shape: bf16[4,36], index: 1, kind: input, shape index: {}]
  %s2 = inlined_call_operand.vmem [shape: f32[4,1], index: 2, kind: input, shape index: {}]
  %s3 = inlined_call_operand.vmem [shape: f32[2,4,256], index: 3, kind: output, shape index: {0}]
  %s4 = inlined_call_operand.vmem [shape: f32[2,4,1], index: 4, kind: output, shape index: {1}]
  %s5 = inlined_call_operand.vmem [shape: f32[2,4,1], index: 5, kind: output, shape index: {2}]
  %6 = xla_tuple %s3, %s4, %s5
  %s7 = sld [smem:[#allocation0]]
  $region61: #{cno_block_forward.2} parent=0
    _
  %s9 = ssub.s32 1, %s7
  %s10 = scalar_select 0, %s9, %s7
  loop: start=0, step=1, limit=4
  $region2: #{cno_block_forward.2} parent=0 // loop_pre_header
    _
  $region3: #{cno_block_forward.2} parent=0 // loop_header
    %s12 = sphi 0, %s16
    %p13 = scmp.ge.s32.totalorder %s12, 4
    %s22 = sphi 0, %s24
    %s25 = sphi 0, %s22
    %s26 = sphi 0, %s25
    %s42 = sphi 0, %s26
    %s46 = sphi 0, %s46
    %s48 = sphi 0, %s46
    %s49 = sphi 0, %s48
    %s63 = sphi 0, %s49
    %s67 = sphi 0, %s67
    %s69 = sphi 0, %s67
    %s70 = sphi 0, %s69
    %s84 = sphi 0, %s70
    %s90 = sphi 0, %s92
    %s93 = sphi 0, %s90
    %s94 = sphi 0, %s93
    %s110 = sphi 0, %s94
    %s116 = sphi 0, %s118
    %s119 = sphi 0, %s116
    %s120 = sphi 0, %s119
    %s136 = sphi 0, %s120
    %s142 = sphi 0, %s144
    %s145 = sphi 0, %s142
    %s146 = sphi 0, %s145
    %s162 = sphi 0, %s146
  $region4: #{cno_block_forward.2} parent=0 // loop_header_branch
    %15 = sbr.rel (%p13) target = $region8
  $region5: #{cno_block_forward.2} parent=0 // loop_body
    %s17 = ssub.s32 %s12, 1
    %s18 = ssub.s32 %s12, 2
    %s19 = sadd.s32 %s12, 1
    %s20 = ssub.s32 %s12, %s19
    %p21 = scmp.eq.s32.totalorder %s20, 0
    %s23 = sadd.s32 %s22, 1
    %s24 = scalar_select %p21, %s22, %s23
    %p27 = pneg %p21
    %p28 = scmp.eq.s32.totalorder %s12, 1
    %p29 = por %p27, %p28
    %p30 = scmp.ne.s32.totalorder %s22, %s25
    %p31 = scmp.eq.s32.totalorder %s12, 0
    %p32 = por %p30, %p31
    %p33 = scmp.ne.s32.totalorder %s22, %s25
    %p34 = scmp.eq.s32.totalorder %s17, 1
    %p35 = por %p33, %p34
    %p36 = scmp.ne.s32.totalorder %s25, %s26
    %p37 = scmp.eq.s32.totalorder %s17, 0
    %p38 = por %p36, %p37
    %p39 = scmp.ne.s32.totalorder %s25, %s26
    %p40 = scmp.eq.s32.totalorder %s18, 1
    %p41 = por %p39, %p40
    %p43 = scmp.ne.s32.totalorder %s26, %s42
    %p44 = scmp.eq.s32.totalorder %s18, 0
    %p45 = por %p43, %p44
    %s47 = sadd.s32 %s46, 1
    %p50 = scmp.eq.s32.totalorder %s12, 1
    %p51 = scmp.ne.s32.totalorder %s46, %s48
    %p52 = scmp.eq.s32.totalorder %s12, 0
    %p53 = por %p51, %p52
    %p54 = scmp.ne.s32.totalorder %s46, %s48
    %p55 = scmp.eq.s32.totalorder %s17, 1
    %p56 = por %p54, %p55
    %p57 = scmp.ne.s32.totalorder %s48, %s49
    %p58 = scmp.eq.s32.totalorder %s17, 0
    %p59 = por %p57, %p58
    %p60 = scmp.ne.s32.totalorder %s48, %s49
    %p61 = scmp.eq.s32.totalorder %s18, 1
    %p62 = por %p60, %p61
    %p64 = scmp.ne.s32.totalorder %s49, %s63
    %p65 = scmp.eq.s32.totalorder %s18, 0
    %p66 = por %p64, %p65
    %s68 = sadd.s32 %s67, 1
    %p71 = scmp.eq.s32.totalorder %s12, 1
    %p72 = scmp.ne.s32.totalorder %s67, %s69
    %p73 = scmp.eq.s32.totalorder %s12, 0
    %p74 = por %p72, %p73
    %p75 = scmp.ne.s32.totalorder %s67, %s69
    %p76 = scmp.eq.s32.totalorder %s17, 1
    %p77 = por %p75, %p76
    %p78 = scmp.ne.s32.totalorder %s69, %s70
    %p79 = scmp.eq.s32.totalorder %s17, 0
    %p80 = por %p78, %p79
    %p81 = scmp.ne.s32.totalorder %s69, %s70
    %p82 = scmp.eq.s32.totalorder %s18, 1
    %p83 = por %p81, %p82
    %p85 = scmp.ne.s32.totalorder %s70, %s84
    %p86 = scmp.eq.s32.totalorder %s18, 0
    %p87 = por %p85, %p86
    %s88 = ssub.s32 %s12, %s19
    %p89 = scmp.eq.s32.totalorder %s88, 0
    %s91 = sadd.s32 %s90, 1
    %s92 = scalar_select %p89, %s90, %s91
    %p95 = pneg %p89
    %p96 = scmp.eq.s32.totalorder %s12, 1
    %p97 = por %p95, %p96
    %p98 = scmp.ne.s32.totalorder %s90, %s93
    %p99 = scmp.eq.s32.totalorder %s12, 0
    %p100 = por %p98, %p99
    %p101 = scmp.ne.s32.totalorder %s90, %s93
    %p102 = scmp.eq.s32.totalorder %s17, 1
    %p103 = por %p101, %p102
    %p104 = scmp.ne.s32.totalorder %s93, %s94
    %p105 = scmp.eq.s32.totalorder %s17, 0
    %p106 = por %p104, %p105
    %p107 = scmp.ne.s32.totalorder %s93, %s94
    %p108 = scmp.eq.s32.totalorder %s18, 1
    %p109 = por %p107, %p108
    %p111 = scmp.ne.s32.totalorder %s94, %s110
    %p112 = scmp.eq.s32.totalorder %s18, 0
    %p113 = por %p111, %p112
    %s114 = ssub.s32 %s12, %s19
    %p115 = scmp.eq.s32.totalorder %s114, 0
    %s117 = sadd.s32 %s116, 1
    %s118 = scalar_select %p115, %s116, %s117
    %p121 = pneg %p115
    %p122 = scmp.eq.s32.totalorder %s12, 1
    %p123 = por %p121, %p122
    %p124 = scmp.ne.s32.totalorder %s116, %s119
    %p125 = scmp.eq.s32.totalorder %s12, 0
    %p126 = por %p124, %p125
    %p127 = scmp.ne.s32.totalorder %s116, %s119
    %p128 = scmp.eq.s32.totalorder %s17, 1
    %p129 = por %p127, %p128
    %p130 = scmp.ne.s32.totalorder %s119, %s120
    %p131 = scmp.eq.s32.totalorder %s17, 0
    %p132 = por %p130, %p131
    %p133 = scmp.ne.s32.totalorder %s119, %s120
    %p134 = scmp.eq.s32.totalorder %s18, 1
    %p135 = por %p133, %p134
    %p137 = scmp.ne.s32.totalorder %s120, %s136
    %p138 = scmp.eq.s32.totalorder %s18, 0
    %p139 = por %p137, %p138
    %s140 = ssub.s32 %s12, %s19
    %p141 = scmp.eq.s32.totalorder %s140, 0
    %s143 = sadd.s32 %s142, 1
    %s144 = scalar_select %p141, %s142, %s143
    %p147 = pneg %p141
    %p148 = scmp.eq.s32.totalorder %s12, 1
    %p149 = por %p147, %p148
    %p150 = scmp.ne.s32.totalorder %s142, %s145
    %p151 = scmp.eq.s32.totalorder %s12, 0
    %p152 = por %p150, %p151
    %p153 = scmp.ne.s32.totalorder %s142, %s145
    %p154 = scmp.eq.s32.totalorder %s17, 1
    %p155 = por %p153, %p154
    %p156 = scmp.ne.s32.totalorder %s145, %s146
    %p157 = scmp.eq.s32.totalorder %s17, 0
    %p158 = por %p156, %p157
    %p159 = scmp.ne.s32.totalorder %s145, %s146
    %p160 = scmp.eq.s32.totalorder %s18, 1
    %p161 = por %p159, %p160
    %p163 = scmp.ne.s32.totalorder %s146, %s162
    %p164 = scmp.eq.s32.totalorder %s18, 0
    %p165 = por %p163, %p164
    %p166 = scmp.le.s32.totalorder 1, %s12
    %p167 = scmp.lt.s32.totalorder %s12, 3
    %p168 = pnand %p166, %p167
    %p169 = pneg %p168
    // Predicated region
    $region9: #{cno_block_forward.2} parent=5 // pred_check
      _
    $region10: #{cno_block_forward.2} parent=5 // pred_check_branch
      %171 = sbr.rel (%p168) target = $region12
    $region11: #{cno_block_forward.2} parent=5 // pred_region
      %s172 = ssub.s32 %s12, 1
      // Predicated region
      $region13: #{cno_block_forward.2} parent=11 // pred_check
        %p173 = pneg %p59
      $region14: #{cno_block_forward.2} parent=11 // pred_check_branch
        %175 = sbr.rel (%p173) target = $region16
      $region15: #{cno_block_forward.2} parent=11 // pred_region
        _
      $region16: #{cno_block_forward.2} parent=11 // pred_fallthru
        _
      // Predicated region
      $region17: #{cno_block_forward.2} parent=11 // pred_check
        %p176 = pneg %p80
      $region18: #{cno_block_forward.2} parent=11 // pred_check_branch
        %178 = sbr.rel (%p176) target = $region20
      $region19: #{cno_block_forward.2} parent=11 // pred_region
        _
      $region20: #{cno_block_forward.2} parent=11 // pred_fallthru
        _
    $region12: #{cno_block_forward.2} parent=5 // pred_fallthru
      _
    %p179 = scmp.lt.s32.totalorder %s12, 2
    // Predicated region
    $region21: #{cno_block_forward.2} parent=5 // pred_check
      %p180 = pneg %p179
    $region22: #{cno_block_forward.2} parent=5 // pred_check_branch
      %182 = sbr.rel (%p180) target = $region24
    $region23: #{cno_block_forward.2} parent=5 // pred_region
      // Predicated region
      $region25: #{cno_block_forward.2} parent=23 // pred_check
        %p183 = pneg %p32
      $region26: #{cno_block_forward.2} parent=23 // pred_check_branch
        %185 = sbr.rel (%p183) target = $region28
      $region27: #{cno_block_forward.2} parent=23 // pred_region
        %p186 = scmp.lt.s32.totalorder %s12, 1
        %s187 = scalar_select %p186, %s12, 1
        %s188 = smul.addr %s187, 3
        %s189 = smul.addr %s188, 4
        %s190 = scalar_lea.vmem %s0, %s189
      $region28: #{cno_block_forward.2} parent=23 // pred_fallthru
        _
    $region24: #{cno_block_forward.2} parent=5 // pred_fallthru
      _
    %p191 = scmp.le.s32.totalorder 1, %s12
    %p192 = scmp.lt.s32.totalorder %s12, 3
    %p193 = pnand %p191, %p192
    %p194 = pneg %p193
    // Predicated region
    $region29: #{cno_block_forward.2} parent=5 // pred_check
      _
    $region30: #{cno_block_forward.2} parent=5 // pred_check_branch
      %196 = sbr.rel (%p193) target = $region32
    $region31: #{cno_block_forward.2} parent=5 // pred_region
      %s197 = ssub.s32 %s12, 1
      %p198 = scmp.lt.s32.totalorder %s17, 1
      %s199 = scalar_select %p198, %s17, 1
      %s200 = smul.addr %s199, 3
      %s201 = smul.addr %s200, 4
      %s202 = scalar_lea.vmem %s0, %s201
      %p203 = pneg %p38
      %p204 = pneg %p35
      %p205 = pneg %p59
      %p206 = pneg %p56
      %p207 = pneg %p80
      %p208 = pneg %p77
      %p209 = pneg %p106
      %p210 = pneg %p103
      %p211 = scmp.lt.s32.totalorder %s17, 1
      %s212 = scalar_select %p211, %s17, 1
      %s213 = smul.addr %s212, 2
      %s214 = smul.addr %s213, 4
      %s215 = scalar_lea.vmem %s3, %s214
      %p216 = pneg %p132
      %p217 = pneg %p129
      %p218 = scmp.lt.s32.totalorder %s17, 1
      %s219 = scalar_select %p218, %s17, 1
      %s220 = smul.addr %s219, 4
      %s221 = scalar_lea.vmem %s4, %s220
      %p222 = pneg %p158
      %p223 = pneg %p155
      %p224 = scmp.lt.s32.totalorder %s17, 1
      %s225 = scalar_select %p224, %s17, 1
      %s226 = smul.addr %s225, 4
      %s227 = scalar_lea.vmem %s5, %s226
      %p228 = scmp.lt.s32.totalorder %s17, 1
      %s229 = scalar_select %p228, %s17, 1
      %s230 = smul.addr %s229, 3
      %s231 = smul.addr %s230, 4
      %s232 = scalar_lea.vmem %s0, %s231
      %p233 = scmp.lt.s32.totalorder %s17, 1
      %s234 = scalar_select %p233, %s17, 1
      %s235 = smul.addr %s234, 2
      %s236 = smul.addr %s235, 4
      %s237 = scalar_lea.vmem %s3, %s236
      %p238 = scmp.lt.s32.totalorder %s17, 1
      %s239 = scalar_select %p238, %s17, 1
      %s240 = smul.addr %s239, 4
      %s241 = scalar_lea.vmem %s4, %s240
      %p242 = scmp.lt.s32.totalorder %s17, 1
      %s243 = scalar_select %p242, %s17, 1
      %s244 = smul.addr %s243, 4
      %s245 = scalar_lea.vmem %s5, %s244
      %v247 = vld [vmem:[%s232] sm:$0xff]
      %v248 = vld [vmem:[%s232 + $0x8] sm:$0xf]
      %v249 = vlaneseq
      %v250 = vand.u32 %v249, 127
      %v251 = vadd.s32 %v250, 128
      %vm252 = vcmp.lt.s32.totalorder %v250, 0
      %v253 = vsub.s32 0, %v250
      %v254 = vsel %vm252, %v253, %v250
      %v255 = vshrl.u32 %v254, 4
      %v256 = vand.u32 %v254, 15
      %v257 = vsub.s32 0, %v256
      %v258 = vsel %vm252, %v257, %v256
      %vm259 = vcmp.lt.s32.totalorder %v251, 0
      %v260 = vsub.s32 0, %v251
      %v261 = vsel %vm259, %v260, %v251
      %v262 = vshrl.u32 %v261, 4
      %v263 = vand.u32 %v261, 15
      %v264 = vsub.s32 0, %v263
      %v265 = vsel %vm259, %v264, %v263
      %vm266 = vcmp.ne.s32.totalorder %v258, 0
      %vm267 = vcmp.ne.s32.totalorder %v265, 0
      %vm268 = vcmp.lt.s32.totalorder %v258, 0
      %vm269 = vcmp.lt.s32.totalorder %v265, 0
      %vm270 = vmand %vm268, %vm266
      %vm271 = vmand %vm269, %vm267
      %v272 = vadd.s32 %v258, 16
      %v273 = vadd.s32 %v265, 16
      %v274 = vsel %vm270, %v272, %v258
      %v275 = vsel %vm271, %v273, %v265
      %vm276 = vcmp.ne.s32.totalorder %v274, 0
      %vm277 = vcmp.ne.s32.totalorder %v275, 0
      %v278 = vsel %vm276, 1, 0
      %v279 = vsel %vm277, 1, 0
      %vm280 = vcmp.eq.s32.totalorder %v278, 1
      %vm281 = vcmp.eq.s32.totalorder %v279, 1
      %283 = vst [vmem:[#allocation1] ss:$2 sm:$0xff] %v247
      %v284 = vld.sshfl [vmem:[#allocation1] sm:$0xff pattern:$0x75316420]
      %v285 = vld.sshfl [vmem:[#allocation1 + $0x8] sm:$0xff pattern:$0x75316420]
      %v288 = vsel %vm280, %v284, 0.0
      %v289 = vsel %vm281, %v285, 0.0
      %v290 = vpack.c.bf16 %v289, %v288
      %292 = vst [vmem:[#allocation1] ss:$2 sm:$0xff] %v247
      %s293 = scalar_lea.vmem [#allocation1], 16
      %294 = vst [vmem:[%s293] ss:$2 sm:$0xff] %v248
      %v295 = vld.sshfl [vmem:[#allocation1] sm:$0xff pattern:$0x75316420]
      %v296 = vld.sshfl [vmem:[#allocation1 + $0x8] sm:$0xff pattern:$0x75316420]
      %v297 = vld.sshfl [vmem:[#allocation1 + $0x10] sm:$0xff pattern:$0x75316420]
      %v301 = vpack.c.bf16 %v296, %v295
      %v302 = vpack.c.bf16 %v297, %v297
      %vm303 = vcmp.ne.s32.totalorder %v274, 15
      %vm304 = vcmp.ne.s32.totalorder %v275, 15
      %v305 = vsel %vm303, 1, 0
      %v306 = vsel %vm304, 1, 0
      %vm307 = vcmp.eq.s32.totalorder %v305, 1
      %vm308 = vcmp.eq.s32.totalorder %v306, 1
      %309 = vst [vmem:[#allocation1] ss:$2 sm:$0xff] %v247
      %s310 = scalar_lea.vmem [#allocation1], 16
      %311 = vst [vmem:[%s310] ss:$2 sm:$0xff] %v248
      %v312 = vld.sshfl [vmem:[#allocation1] sm:$0xff pattern:$0x75316420]
      %v313 = vld.sshfl [vmem:[#allocation1 + $0x8] sm:$0xff pattern:$0x75316420]
      %v314 = vld.sshfl [vmem:[#allocation1 + $0x10] sm:$0xff pattern:$0x75316420]
      %315 = vrot.lane.b32.xlu0 %v312, 126
      %v316 = vpop.permute.xlu0 %315
      %317 = vrot.lane.b32.xlu0 %v313, 126
      %v318 = vpop.permute.xlu0 %317
      %319 = vrot.lane.b32.xlu0 %v314, 126
      %v320 = vpop.permute.xlu0 %319
      %vm321 = vcmask 1031168
      %v322 = vsel %vm321, %v316, %v318
      %v323 = vsel %vm321, %v318, %v320
      %v326 = vsel %vm307, %v322, 0.0
      %v327 = vsel %vm308, %v323, 0.0
      %v328 = vpack.c.bf16 %v327, %v326
      %329 = vst [vmem:[#allocation1] ss:$2 sm:$0xff] %v247
      %s330 = scalar_lea.vmem [#allocation1], 16
      %331 = vst [vmem:[%s330] ss:$2 sm:$0xff] %v248
      %v332 = vld.sshfl [vmem:[#allocation1] sm:$0xff pattern:$0x75316420]
      %v333 = vld.sshfl [vmem:[#allocation1 + $0x8] sm:$0xff pattern:$0x75316420]
      %v334 = vld.sshfl [vmem:[#allocation1 + $0x10] sm:$0xff pattern:$0x75316420]
      %335 = vrot.lane.b32.xlu0 %v332, 112
      %v336 = vpop.permute.xlu0 %335
      %337 = vrot.lane.b32.xlu0 %v333, 112
      %v338 = vpop.permute.xlu0 %337
      %339 = vrot.lane.b32.xlu0 %v334, 112
      %v340 = vpop.permute.xlu0 %339
      %vm341 = vcmask 916480
      %v342 = vsel %vm341, %v336, %v338
      %v343 = vsel %vm341, %v338, %v340
      %v346 = vsel %vm280, %v342, 0.0
      %v347 = vsel %vm281, %v343, 0.0
      %v348 = vpack.c.bf16 %v347, %v346
      %349 = vst [vmem:[#allocation1] ss:$2 sm:$0xff] %v247
      %s350 = scalar_lea.vmem [#allocation1], 16
      %351 = vst [vmem:[%s350] ss:$2 sm:$0xff] %v248
      %v352 = vld.sshfl [vmem:[#allocation1] sm:$0xff pattern:$0x75316420]
      %v353 = vld.sshfl [vmem:[#allocation1 + $0x8] sm:$0xff pattern:$0x75316420]
      %v354 = vld.sshfl [vmem:[#allocation1 + $0x10] sm:$0xff pattern:$0x75316420]
      %v358 = vpack.c.bf16 %v353, %v352
      %v359 = vpack.c.bf16 %v354, %v354
      %360 = vst [vmem:[#allocation1] ss:$2 sm:$0xff] %v247
      %s361 = scalar_lea.vmem [#allocation1], 16
      %362 = vst [vmem:[%s361] ss:$2 sm:$0xff] %v248
      %v363 = vld.sshfl [vmem:[#allocation1] sm:$0xff pattern:$0x75316420]
      %v364 = vld.sshfl [vmem:[#allocation1 + $0x8] sm:$0xff pattern:$0x75316420]
      %v365 = vld.sshfl [vmem:[#allocation1 + $0x10] sm:$0xff pattern:$0x75316420]
      %366 = vrot.lane.b32.xlu0 %v363, 110
      %v367 = vpop.permute.xlu0 %366
      %368 = vrot.lane.b32.xlu0 %v364, 110
      %v369 = vpop.permute.xlu0 %368
      %370 = vrot.lane.b32.xlu0 %v365, 110
      %v371 = vpop.permute.xlu0 %370
      %vm372 = vcmask 900096
      %v373 = vsel %vm372, %v367, %v369
      %v374 = vsel %vm372, %v369, %v371
      %v377 = vsel %vm307, %v373, 0.0
      %v378 = vsel %vm308, %v374, 0.0
      %v379 = vpack.c.bf16 %v378, %v377
      %380 = vst [vmem:[#allocation1] ss:$2 sm:$0xff] %v247
      %s381 = scalar_lea.vmem [#allocation1], 16
      %382 = vst [vmem:[%s381] ss:$2 sm:$0xff] %v248
      %v383 = vld.sshfl [vmem:[#allocation1] sm:$0xff pattern:$0x75316420]
      %v384 = vld.sshfl [vmem:[#allocation1 + $0x8] sm:$0xff pattern:$0x75316420]
      %v385 = vld.sshfl [vmem:[#allocation1 + $0x10] sm:$0xff pattern:$0x75316420]
      %386 = vrot.lane.b32.xlu0 %v383, 96
      %v387 = vpop.permute.xlu0 %386
      %388 = vrot.lane.b32.xlu0 %v384, 96
      %v389 = vpop.permute.xlu0 %388
      %390 = vrot.lane.b32.xlu0 %v385, 96
      %v391 = vpop.permute.xlu0 %390
      %vm392 = vcmask 785408
      %v393 = vsel %vm392, %v387, %v389
      %v394 = vsel %vm392, %v389, %v391
      %v397 = vsel %vm280, %v393, 0.0
      %v398 = vsel %vm281, %v394, 0.0
      %v399 = vpack.c.bf16 %v398, %v397
      %400 = vst [vmem:[#allocation1] ss:$2 sm:$0xff] %v247
      %s401 = scalar_lea.vmem [#allocation1], 16
      %402 = vst [vmem:[%s401] ss:$2 sm:$0xff] %v248
      %v403 = vld.sshfl [vmem:[#allocation1] sm:$0xff pattern:$0x75316420]
      %v404 = vld.sshfl [vmem:[#allocation1 + $0x8] sm:$0xff pattern:$0x75316420]
      %v405 = vld.sshfl [vmem:[#allocation1 + $0x10] sm:$0xff pattern:$0x75316420]
      %v409 = vpack.c.bf16 %v404, %v403
      %v410 = vpack.c.bf16 %v405, %v405
      %411 = vst [vmem:[#allocation1] ss:$2 sm:$0xff] %v247
      %s412 = scalar_lea.vmem [#allocation1], 16
      %413 = vst [vmem:[%s412] ss:$2 sm:$0xff] %v248
      %v414 = vld.sshfl [vmem:[#allocation1] sm:$0xff pattern:$0x75316420]
      %v415 = vld.sshfl [vmem:[#allocation1 + $0x8] sm:$0xff pattern:$0x75316420]
      %v416 = vld.sshfl [vmem:[#allocation1 + $0x10] sm:$0xff pattern:$0x75316420]
      %417 = vrot.lane.b32.xlu0 %v414, 94
      %v418 = vpop.permute.xlu0 %417
      %419 = vrot.lane.b32.xlu0 %v415, 94
      %v420 = vpop.permute.xlu0 %419
      %421 = vrot.lane.b32.xlu0 %v416, 94
      %v422 = vpop.permute.xlu0 %421
      %vm423 = vcmask 769024
      %v424 = vsel %vm423, %v418, %v420
      %v425 = vsel %vm423, %v420, %v422
      %v428 = vsel %vm307, %v424, 0.0
      %v429 = vsel %vm308, %v425, 0.0
      %v430 = vpack.c.bf16 %v429, %v428
      %v432 = vunpack.c.l.b16 %v290
      %v433 = vunpack.c.h.b16 %v290
      %v434 = vpack.c.b16 %v432, %v432
      %v435 = vpack.c.b16 %v433, %v433
      %v438 = vunpack.c.l.b16 %v301
      %v439 = vunpack.c.h.b16 %v301
      %v440 = vunpack.c.l.b16 %v302
      %v441 = vpack.c.b16 %v438, %v438
      %v442 = vpack.c.b16 %v439, %v439
      %v443 = vpack.c.b16 %v440, %v440
      %v444 = vrot.slane %v441, 6
      %v445 = vrot.slane %v442, 6
      %v446 = vrot.slane %v443, 6
      %447 = vrot.lane.b32.xlu0 %v444, 127
      %v448 = vpop.permute.xlu0 %447
      %449 = vrot.lane.b32.xlu0 %v445, 127
      %v450 = vpop.permute.xlu0 %449
      %451 = vrot.lane.b32.xlu0 %v446, 127
      %v452 = vpop.permute.xlu0 %451
      %vm453 = vcmask 1039360
      %v454 = vsel %vm453, %v448, %v450
      %v455 = vsel %vm453, %v450, %v452
      %v457 = vunpack.c.l.b16 %v328
      %v458 = vunpack.c.h.b16 %v328
      %v459 = vpack.c.b16 %v457, %v457
      %v460 = vpack.c.b16 %v458, %v458
      %v462 = vunpack.c.l.b16 %v348
      %v463 = vunpack.c.h.b16 %v348
      %v464 = vpack.c.b16 %v462, %v462
      %v465 = vpack.c.b16 %v463, %v463
      %v466 = vrot.slane %v464, 2
      %v467 = vrot.slane %v465, 2
      %v470 = vunpack.c.l.b16 %v358
      %v471 = vunpack.c.h.b16 %v358
      %v472 = vunpack.c.l.b16 %v359
      %v473 = vpack.c.b16 %v470, %v470
      %v474 = vpack.c.b16 %v471, %v471
      %v475 = vpack.c.b16 %v472, %v472
      %476 = vrot.lane.b32.xlu0 %v473, 111
      %v477 = vpop.permute.xlu0 %476
      %478 = vrot.lane.b32.xlu0 %v474, 111
      %v479 = vpop.permute.xlu0 %478
      %480 = vrot.lane.b32.xlu0 %v475, 111
      %v481 = vpop.permute.xlu0 %480
      %vm482 = vcmask 908288
      %v483 = vsel %vm482, %v477, %v479
      %v484 = vsel %vm482, %v479, %v481
      %v486 = vunpack.c.l.b16 %v379
      %v487 = vunpack.c.h.b16 %v379
      %v488 = vpack.c.b16 %v486, %v486
      %v489 = vpack.c.b16 %v487, %v487
      %v490 = vrot.slane %v488, 6
      %v491 = vrot.slane %v489, 6
      %v493 = vunpack.c.l.b16 %v399
      %v494 = vunpack.c.h.b16 %v399
      %v495 = vpack.c.b16 %v493, %v493
      %v496 = vpack.c.b16 %v494, %v494
      %v499 = vunpack.c.l.b16 %v409
      %v500 = vunpack.c.h.b16 %v409
      %v501 = vunpack.c.l.b16 %v410
      %v502 = vpack.c.b16 %v499, %v499
      %v503 = vpack.c.b16 %v500, %v500
      %v504 = vpack.c.b16 %v501, %v501
      %v505 = vrot.slane %v502, 2
      %v506 = vrot.slane %v503, 2
      %v507 = vrot.slane %v504, 2
      %508 = vrot.lane.b32.xlu0 %v505, 95
      %v509 = vpop.permute.xlu0 %508
      %510 = vrot.lane.b32.xlu0 %v506, 95
      %v511 = vpop.permute.xlu0 %510
      %512 = vrot.lane.b32.xlu0 %v507, 95
      %v513 = vpop.permute.xlu0 %512
      %vm514 = vcmask 777216
      %v515 = vsel %vm514, %v509, %v511
      %v516 = vsel %vm514, %v511, %v513
      %v518 = vunpack.c.l.b16 %v430
      %v519 = vunpack.c.h.b16 %v430
      %v520 = vpack.c.b16 %v518, %v518
      %v521 = vpack.c.b16 %v519, %v519
      %vm522 = vcmask 1041408
      %v525 = vsel %vm522, %v434, %v454
      %v528 = vsel %vm522, %v435, %v455
      %vm529 = vcmask 1043456
      %v531 = vsel %vm529, %v525, %v459
      %v533 = vsel %vm529, %v528, %v460
      %vm534 = vcmask 1045504
      %v536 = vsel %vm534, %v531, %v466
      %v539 = vsel %vm534, %v533, %v467
      %v543 = vsel %vm522, %v483, %v490
      %v546 = vsel %vm522, %v484, %v491
      %v548 = vsel %vm529, %v543, %v495
      %v550 = vsel %vm529, %v546, %v496
      %v552 = vsel %vm534, %v548, %v515
      %v555 = vsel %vm534, %v550, %v516
      %v557 = vld [vmem:[%s1] sm:$0x3]
      %v558 = vld [vmem:[%s2] sm:$0xf]
      %560 = vset.pattern.permute.xlu0 0
      %561 = vperm.xlu0 %560, %v558
      %v562 = vpop.permute.xlu0 %561
      %vm564 = vcmask 293888
      %v566 = vsel %vm564, %v557, 0
      %v569 = vsel %vm522, %v520, 0
      %v572 = vsel %vm522, %v521, 0
      %574 = vmatpush.bf16.msra.mxu0 0
      %575 = vmatpush.bf16.msra.mxu0 0
      %576 = vmatpush.bf16.msra.mxu0 0
      %577 = vmatpush.bf16.msra.mxu0 0
      %578 = vmatpush.bf16.msra.mxu0 0
      %579 = vmatpush.bf16.msra.mxu0 %v569
      %580 = vmatpush.bf16.msra.mxu0 %v552
      %581 = vmatpush.bf16.msra.mxu0 %v536
      %582 = vmatmul.bf16.gmra.mxu0 %v566
      %v583 = vpop.f32.mrf.mxu0
      %v584 = vadd.f32 %v562, %v583
      %v585 = vpop.f32.mrf.mxu0
      %586 = vdwg.mxu0
      %587 = vmatpush.bf16.msra.mxu0 0
      %588 = vmatpush.bf16.msra.mxu0 0
      %589 = vmatpush.bf16.msra.mxu0 0
      %590 = vmatpush.bf16.msra.mxu0 0
      %591 = vmatpush.bf16.msra.mxu0 0
      %592 = vmatpush.bf16.msra.mxu0 %v572
      %593 = vmatpush.bf16.msra.mxu0 %v555
      %594 = vmatpush.bf16.msra.mxu0 %v539
      %595 = vmatmul.bf16.gmra.mxu0 %v566
      %v596 = vpop.f32.mrf.mxu0
      %v597 = vadd.f32 %v562, %v596
      %v598 = vpop.f32.mrf.mxu0
      %599 = vdwg.mxu0
      %v602 = vrot.slane %v597, 4
      %v603 = vsel %vm529, %v584, %v602
      %605 = vst [vmem:[%s237] sm:$0xff] %v603
      %v606 = vsel %vm529, %v584, 0.0
      %v607 = vsel %vm529, %v597, 0.0
      %v608 = vadd.f32 %v606, %v607
      %609 = vadd.xlane.f32.xlu0 %v608
      %v610 = vpop.xlane.xlu0 %609
      %vm611 = vcmask 3072
      %612 = vst.msk [vmem:[%s241] sm:$0xf] %vm611, %v610
      %v613 = vmul.f32 %v584, %v584
      %v614 = vmul.f32 %v597, %v597
      %v615 = vsel %vm529, %v613, 0.0
      %v616 = vsel %vm529, %v614, 0.0
      %v617 = vadd.f32 %v615, %v616
      %618 = vadd.xlane.f32.xlu0 %v617
      %v619 = vpop.xlane.xlu0 %618
      %620 = vst.msk [vmem:[%s245] sm:$0xf] %vm611, %v619
      %p621 = scmp.lt.s32.totalorder %s17, 1
      %s622 = scalar_select %p621, %s17, 1
      %s623 = smul.addr %s622, 2
      %s624 = smul.addr %s623, 4
      %s625 = scalar_lea.vmem %s3, %s624
      %p626 = scmp.lt.s32.totalorder %s17, 1
      %s627 = scalar_select %p626, %s17, 1
      %s628 = smul.addr %s627, 4
      %s629 = scalar_lea.vmem %s4, %s628
      %p630 = scmp.lt.s32.totalorder %s17, 1
      %s631 = scalar_select %p630, %s17, 1
      %s632 = smul.addr %s631, 4
      %s633 = scalar_lea.vmem %s5, %s632
      // Predicated region
      $region33: #{cno_block_forward.2} parent=31 // pred_check
        %p634 = pneg %p103
      $region34: #{cno_block_forward.2} parent=31 // pred_check_branch
        %636 = sbr.rel (%p634) target = $region36
      $region35: #{cno_block_forward.2} parent=31 // pred_region
        _
      $region36: #{cno_block_forward.2} parent=31 // pred_fallthru
        _
      // Predicated region
      $region37: #{cno_block_forward.2} parent=31 // pred_check
        %p637 = pneg %p129
      $region38: #{cno_block_forward.2} parent=31 // pred_check_branch
        %639 = sbr.rel (%p637) target = $region40
      $region39: #{cno_block_forward.2} parent=31 // pred_region
        _
      $region40: #{cno_block_forward.2} parent=31 // pred_fallthru
        _
      // Predicated region
      $region41: #{cno_block_forward.2} parent=31 // pred_check
        %p640 = pneg %p155
      $region42: #{cno_block_forward.2} parent=31 // pred_check_branch
        %642 = sbr.rel (%p640) target = $region44
      $region43: #{cno_block_forward.2} parent=31 // pred_region
        _
      $region44: #{cno_block_forward.2} parent=31 // pred_fallthru
        _
    $region32: #{cno_block_forward.2} parent=5 // pred_fallthru
      _
    %p643 = scmp.le.s32.totalorder 2, %s12
    // Predicated region
    $region45: #{cno_block_forward.2} parent=5 // pred_check
      %p644 = pneg %p643
    $region46: #{cno_block_forward.2} parent=5 // pred_check_branch
      %646 = sbr.rel (%p644) target = $region48
    $region47: #{cno_block_forward.2} parent=5 // pred_region
      %s647 = ssub.s32 %s12, 2
      // Predicated region
      $region49: #{cno_block_forward.2} parent=47 // pred_check
        %p648 = pneg %p109
      $region50: #{cno_block_forward.2} parent=47 // pred_check_branch
        %650 = sbr.rel (%p648) target = $region52
      $region51: #{cno_block_forward.2} parent=47 // pred_region
        %p651 = scmp.lt.s32.totalorder %s18, 1
        %s652 = scalar_select %p651, %s18, 1
        %s653 = smul.addr %s652, 2
        %s654 = smul.addr %s653, 4
        %s655 = scalar_lea.vmem %s3, %s654
      $region52: #{cno_block_forward.2} parent=47 // pred_fallthru
        _
      // Predicated region
      $region53: #{cno_block_forward.2} parent=47 // pred_check
        %p656 = pneg %p135
      $region54: #{cno_block_forward.2} parent=47 // pred_check_branch
        %658 = sbr.rel (%p656) target = $region56
      $region55: #{cno_block_forward.2} parent=47 // pred_region
        %p659 = scmp.lt.s32.totalorder %s18, 1
        %s660 = scalar_select %p659, %s18, 1
        %s661 = smul.addr %s660, 4
        %s662 = scalar_lea.vmem %s4, %s661
      $region56: #{cno_block_forward.2} parent=47 // pred_fallthru
        _
      // Predicated region
      $region57: #{cno_block_forward.2} parent=47 // pred_check
        %p663 = pneg %p161
      $region58: #{cno_block_forward.2} parent=47 // pred_check_branch
        %665 = sbr.rel (%p663) target = $region60
      $region59: #{cno_block_forward.2} parent=47 // pred_region
        %p666 = scmp.lt.s32.totalorder %s18, 1
        %s667 = scalar_select %p666, %s18, 1
        %s668 = smul.addr %s667, 4
        %s669 = scalar_lea.vmem %s5, %s668
      $region60: #{cno_block_forward.2} parent=47 // pred_fallthru
        _
    $region48: #{cno_block_forward.2} parent=5 // pred_fallthru
      _
  $region6: #{cno_block_forward.2} parent=0 // loop_footer
    %s16 = sadd.s32 1, %s12
  $region7: #{cno_block_forward.2} parent=0 // loop_footer_branch
    %11 = sbr.rel target = $region3
  $region8: #{cno_block_forward.2} parent=0 // loop_exit
    _

</llo_original>
